<compile_context>
chip_gen: v7x
topology: tpu7x:2x2x1
jax: 0.10.0
libtpu: 0.0.40
codegen_flags: <defaults>
</compile_context>

<pallas_src>
import jax
import jax.numpy as jnp
from jax.experimental import pallas as pl
from jax.experimental.pallas import tpu as pltpu


def tanhplus_kernel(x_ref, o_ref):
    x = x_ref[...]
    # Single EUP tanh; compute in f32 (v5e EUP has no bf16 path, and the casts
    # are cheap VPU filler hidden under the DMA on v6e/v7x).  mul/add -> VPU.
    y = 0.5 + 0.5 * jnp.tanh(x.astype(jnp.float32))
    o_ref[...] = y.astype(o_ref.dtype)


def _pick_lane_width(n: int, granule: int):
    """Pick a wide lane dim (multiple of 128). Returns (lane_w, needs_pad)."""
    # Prefer a factorization whose row count is also a multiple of the sublane
    # packing granule (full vregs, fully unmasked wide stores).
    for cand in (8192, 4096, 2048, 1024, 512, 256, 128):
        if n % (cand * granule) == 0:
            return cand, False
    for cand in (8192, 4096, 2048, 1024, 512, 256, 128):
        if n % cand == 0:
            return cand, False
    # Ragged flat length: pick a pad target that bounds the padding overhead
    # for small arrays while staying lane-dense for large ones.
    for cand in (1024, 512, 256, 128):
        if n >= cand * granule:
            return cand, True
    return 128, True


def tanhplus(x: jax.Array, *, target_block_bytes: int = 2 * 1024 * 1024) -> jax.Array:
    """Apply y = 0.5 + 0.5*tanh(x) elementwise via a Pallas TPU kernel."""
    orig_shape = x.shape
    orig_dtype = x.dtype
    n = x.size
    itemsize = jnp.dtype(orig_dtype).itemsize

    # Sublane packing granule: 8 rows for 32-bit, 16 for bf16, 32 for int8/fp8.
    granule = 8 * max(1, 4 // itemsize)

    x_flat = jnp.ravel(x)
    lane_w, needs_pad = _pick_lane_width(n, granule)

    if needs_pad:
        # Pad once up to a full (granule x lane_w) slab.
        # TODO(synk): mask the ragged tail in-kernel to skip this extra copy.
        pad_to = lane_w * granule
        n_pad = pl.cdiv(n, pad_to) * pad_to
        x_flat = jnp.pad(x_flat, (0, n_pad - n))

    rows = x_flat.size // lane_w
    x2d = x_flat.reshape(rows, lane_w)

    # Row tile sized for ~target_block_bytes per block (1-4 MiB per buffer is
    # the measured sweet spot).  2 arrays x 2 pipeline buffers x 2 MiB = 8 MiB,
    # well under the 32 MiB default scoped VMEM and v7x's 64 MiB physical VMEM.
    tr = (target_block_bytes // (lane_w * itemsize)) // granule * granule
    tr = max(granule, tr)
    if tr >= rows:
        tr = rows  # full-extent block along the sublane dim is always legal
    grid = (pl.cdiv(rows, tr),)

    out2d = pl.pallas_call(
        tanhplus_kernel,
        out_shape=jax.ShapeDtypeStruct((rows, lane_w), orig_dtype),
        grid_spec=pltpu.PrefetchScalarGridSpec(
            num_scalar_prefetch=0,
            grid=grid,
            in_specs=[pl.BlockSpec((tr, lane_w), lambda i: (i, 0))],
            out_specs=pl.BlockSpec((tr, lane_w), lambda i: (i, 0)),
        ),
        compiler_params=pltpu.CompilerParams(
            dimension_semantics=("parallel",),  # shards the grid across v7x's 2 TCs
        ),
        cost_estimate=pl.CostEstimate(
            flops=2 * n,
            transcendentals=n,
            bytes_accessed=2 * n * itemsize,
        ),
    )(x2d)

    if needs_pad:
        return out2d.reshape(-1)[:n].reshape(orig_shape)
    return out2d.reshape(orig_shape)


if __name__ == "__main__":
    key = jax.random.PRNGKey(0)
    # Small NCHW input consistent with typical conv-style usage.
    x = jax.random.normal(key, (2, 4, 16, 16), dtype=jnp.float32)

    y = tanhplus(x)
    y = jax.block_until_ready(y)

    # Reference check in plain JAX.
    y_ref = 0.5 + jnp.tanh(x) * 0.5
    assert y.shape == x.shape and y.dtype == x.dtype
    assert jnp.allclose(y, y_ref, atol=1e-6, rtol=1e-6)

    print("KERNEL_OK")
</pallas_src>

<mosaic_0001>
module attributes {stable_mosaic.version = 11 : i64} {
  func.func @tanhplus_kernel(%arg0: i32, %arg1: memref<8x256xf32, #tpu.memory_space<vmem>>, %arg2: memref<8x256xf32, #tpu.memory_space<vmem>>) attributes {dimension_semantics = [#tpu.dimension_semantics<parallel>], iteration_bounds = array<i64: 1>, scalar_prefetch = 0 : i64, scratch_operands = 0 : i64, tpu.core_type = #tpu.core_type<tc>, window_params = [{transform_indices = @transform_0, window_bounds = array<i64: 8, 256>}, {transform_indices = @transform_1, window_bounds = array<i64: 8, 256>}]} {
    %c0 = arith.constant 0 : index
    %c0_0 = arith.constant 0 : index
    %0 = vector.load %arg1[%c0, %c0_0] : memref<8x256xf32, #tpu.memory_space<vmem>>, vector<8x256xf32>
    %1 = math.tanh %0 : vector<8x256xf32>
    %cst = arith.constant 5.000000e-01 : f32
    %2 = vector.broadcast %cst : f32 to vector<8x256xf32>
    %3 = arith.mulf %2, %1 : vector<8x256xf32>
    %cst_1 = arith.constant 5.000000e-01 : f32
    %4 = vector.broadcast %cst_1 : f32 to vector<8x256xf32>
    %5 = arith.addf %4, %3 : vector<8x256xf32>
    %c0_2 = arith.constant 0 : index
    %c0_3 = arith.constant 0 : index
    %6 = vector.load %arg2[%c0_2, %c0_3] : memref<8x256xf32, #tpu.memory_space<vmem>>, vector<8x256xf32>
    tpu.vector_store %arg2[%c0_2, %c0_3], %5 {strides = array<i32>} : memref<8x256xf32, #tpu.memory_space<vmem>>, vector<8x256xf32>,
    return
  }
  func.func @transform_0(%arg0: i32) -> (i32, i32) {
    %c0_i32 = arith.constant 0 : i32
    %c0_i32_0 = arith.constant 0 : i32
    return %arg0, %c0_i32 : i32, i32
  }
  func.func @transform_1(%arg0: i32) -> (i32, i32) {
    %c0_i32 = arith.constant 0 : i32
    %c0_i32_0 = arith.constant 0 : i32
    return %arg0, %c0_i32 : i32, i32
  }
}

</mosaic_0001>

<llo_original>
// kernel: tpu_custom_call.1
$region0: #{tpu_custom_call.1}
  #allocation0 [shape = 'u32[]', space=smem, size = 0x4, offset = 0x4, fixed_abs, tag = 'smem constant byte address 0x4 - core index']
  #allocation1 [shape = 'u32[144,128]{1,0:T(1,128)}', space=vmem, size = 0x12000, scoped, tag = 'internal scratch']
  %s0 = inlined_call_operand.hbm [shape: f32[8,256], index: 0, kind: input, shape index: {}]
  %s1 = inlined_call_operand.hbm [shape: f32[8,256], index: 1, kind: output, shape index: {}]
  %s2 = sld [smem:[#allocation0]]
  $region18: #{tpu_custom_call.1} parent=0
    _
  %s4 = ssub.s32 1, %s2
  %s5 = scalar_select 0, %s4, %s2
  $region1: #{tpu_custom_call.1} parent=0
    #allocation2 [shape = 'u8[8192]{0}', space=vmem, size = 0x2000, scoped, tag = 'input window, operand 0, single buffered']
    #allocation3 [shape = 's32[1]{0}', space=sflag, size = 0x4, scoped, tag = 'scoped memory for tpu_custom_call.1']
    #allocation4 [shape = 's32[1]{0}', space=sflag, size = 0x4, scoped, tag = 'scoped memory for tpu_custom_call.1']
    #allocation5 [shape = 'u8[8192]{0}', space=vmem, size = 0x2000, scoped, tag = 'output window, operand 0, single buffered']
    %6 = vsyncpa [#allocation3], 0
    %7 = vsyncpa [#allocation4], 0
    // Predicated region
    $region2: #{tpu_custom_call.1} parent=1 // pred_check
      _
    $region3: #{tpu_custom_call.1} parent=1 // pred_check_branch
      %9 = sbr.rel (0) target = $region5
    $region4: #{tpu_custom_call.1} parent=1 // pred_region
      %s11 = ssub.s32 256, 256
      %12 = vsyncadd [#allocation3], %s11
      %s14 = sshll.u32 [#allocation2], 4
      %s15 = int_to_ptr.vmem [resolvable:$true] %s14
      %17 = dma.hbm_to_vmem [thread:$0]  %s0, 256, %s15, [#allocation3]
    $region5: #{tpu_custom_call.1} parent=1 // pred_fallthru
      _
    // Predicated region
    $region6: #{tpu_custom_call.1} parent=1 // pred_check
      _
    $region7: #{tpu_custom_call.1} parent=1 // pred_check_branch
      %19 = sbr.rel (0) target = $region9
    $region8: #{tpu_custom_call.1} parent=1 // pred_region
      %20 = dma.done [#allocation3], 256
    $region9: #{tpu_custom_call.1} parent=1 // pred_fallthru
      _
    %v21 = vld [vmem:[#allocation2] sm:$0xff]
    %v22 = vld [vmem:[#allocation2 + $0x8] sm:$0xff]
    %v23 = vtanh.pop %v21
    %v24 = vtanh.pop %v22
    %v25 = vmul.f32 %v23, 0.5
    %v26 = vmul.f32 %v24, 0.5
    %v27 = vadd.f32 %v25, 0.5
    %v28 = vadd.f32 %v26, 0.5
    %29 = vst [vmem:[#allocation5] sm:$0xff] %v27
    %30 = vst [vmem:[#allocation5 + $0x8] sm:$0xff] %v28
    // Predicated region
    $region10: #{tpu_custom_call.1} parent=1 // pred_check
      _
    $region11: #{tpu_custom_call.1} parent=1 // pred_check_branch
      %32 = sbr.rel (0) target = $region13
    $region12: #{tpu_custom_call.1} parent=1 // pred_region
      %s34 = ssub.s32 256, 256
      %35 = vsyncadd [#allocation4], %s34
      %s37 = sshll.u32 [#allocation5], 4
      %s38 = int_to_ptr.vmem [resolvable:$true] %s37
      %40 = dma.vmem_to_hbm [thread:$0]  %s38, 256, %s1, [#allocation4]
    $region13: #{tpu_custom_call.1} parent=1 // pred_fallthru
      _
    // Predicated region
    $region14: #{tpu_custom_call.1} parent=1 // pred_check
      _
    $region15: #{tpu_custom_call.1} parent=1 // pred_check_branch
      %42 = sbr.rel (0) target = $region17
    $region16: #{tpu_custom_call.1} parent=1 // pred_region
      %43 = dma.done [#allocation4], 256
    $region17: #{tpu_custom_call.1} parent=1 // pred_fallthru
      _
    %44 = vsyncpa [#allocation3], 1
    %45 = vsyncpa [#allocation4], 1

</llo_original>
